<compile_context>
chip_gen: v7x
topology: tpu7x:2x2x1
jax: 0.10.0
libtpu: 0.0.40
codegen_flags: <defaults>
</compile_context>

<pallas_src>
import functools

import jax
import jax.numpy as jnp
from jax.experimental import pallas as pl
from jax.experimental.pallas import tpu as pltpu

LANE = 128
TILE_ROWS = 1024  # 1024 * 128 * 4B = 512 KiB per input block


def _mse_sum_kernel(y_ref, l_ref, out_ref, acc_ref, *, tile_rows, valid_rows,
                    need_mask):
    i = pl.program_id(0)

    @pl.when(i == 0)
    def _():
        acc_ref[...] = jnp.zeros_like(acc_ref)

    d = y_ref[...].astype(jnp.float32) - l_ref[...].astype(jnp.float32)
    if need_mask:
        # Rows past `valid_rows` belong to the padded partial last block;
        # zero their contribution before squaring (OOB block data is garbage).
        row = i * tile_rows + jax.lax.broadcasted_iota(
            jnp.int32, (tile_rows, LANE), 0)
        d = jnp.where(row < valid_rows, d, jnp.float32(0.0))
    acc_ref[...] += d * d

    @pl.when(i == pl.num_programs(0) - 1)
    def _():
        out_ref[0] = jnp.sum(acc_ref[...])


def my_loss(y_hat, label):
    """Pallas equivalent of My_loss.forward: mean((y_hat - label) ** 2)."""
    assert y_hat.shape == label.shape
    total_n = int(y_hat.size)

    flat_y = y_hat.reshape(-1)
    flat_l = label.reshape(-1)

    rows = total_n // LANE  # lane-aligned bulk rows
    tail = total_n % LANE   # <128-element remainder (rare)

    total_sum = jnp.float32(0.0)

    if rows > 0:
        if tail:
            bulk = rows * LANE
            y2d = flat_y[:bulk].reshape(rows, LANE)
            l2d = flat_l[:bulk].reshape(rows, LANE)
        else:
            y2d = flat_y.reshape(rows, LANE)
            l2d = flat_l.reshape(rows, LANE)

        # Block rows: as large as possible (up to TILE_ROWS) but never larger
        # than the array itself (block == full array dims is always legal).
        tile_rows = rows if rows <= TILE_ROWS else TILE_ROWS
        grid = (pl.cdiv(rows, tile_rows),)
        need_mask = (rows % tile_rows) != 0

        kernel = functools.partial(
            _mse_sum_kernel,
            tile_rows=tile_rows,
            valid_rows=rows,
            need_mask=need_mask,
        )

        out = pl.pallas_call(
            kernel,
            out_shape=jax.ShapeDtypeStruct((1,), jnp.float32),
            grid_spec=pltpu.PrefetchScalarGridSpec(
                num_scalar_prefetch=0,
                grid=grid,
                in_specs=[
                    pl.BlockSpec((tile_rows, LANE), lambda i: (i, 0)),
                    pl.BlockSpec((tile_rows, LANE), lambda i: (i, 0)),
                ],
                out_specs=pl.BlockSpec(memory_space=pltpu.SMEM),
                scratch_shapes=[pltpu.VMEM((tile_rows, LANE), jnp.float32)],
            ),
            compiler_params=pltpu.CompilerParams(
                dimension_semantics=("arbitrary",)),  # reduction axis
        )(y2d, l2d)
        total_sum = total_sum + out[0]

    if tail > 0:
        # Tiny (<128 element) remainder: not worth a kernel launch.
        ty = flat_y[rows * LANE:].astype(jnp.float32)
        tl = flat_l[rows * LANE:].astype(jnp.float32)
        total_sum = total_sum + jnp.sum((ty - tl) ** 2)

    return total_sum / jnp.float32(total_n)


if __name__ == "__main__":
    key = jax.random.PRNGKey(0)
    k1, k2, k3, k4, k5, k6 = jax.random.split(key, 6)

    # Primary check: small NCHW prediction/label pair (numel % 128 == 0).
    y_hat = jax.random.normal(k1, (2, 4, 16, 16), dtype=jnp.float32)
    label = jax.random.normal(k2, (2, 4, 16, 16), dtype=jnp.float32)
    loss = my_loss(y_hat, label)
    jax.block_until_ready(loss)
    ref = jnp.mean((y_hat - label) ** 2)
    assert jnp.allclose(loss, ref, rtol=1e-5, atol=1e-6), (loss, ref)

    # Extra check: multi-block grid with a ragged (masked) last block
    # (rows = 1120, tile_rows = 1024, grid = 2).
    y2 = jax.random.normal(k3, (5, 7, 64, 64), dtype=jnp.float32)
    l2 = jax.random.normal(k4, (5, 7, 64, 64), dtype=jnp.float32)
    loss2 = my_loss(y2, l2)
    jax.block_until_ready(loss2)
    ref2 = jnp.mean((y2 - l2) ** 2)
    assert jnp.allclose(loss2, ref2, rtol=1e-5, atol=1e-6), (loss2, ref2)

    # Extra check: numel not a multiple of 128 (kernel bulk + jnp tail).
    y3 = jax.random.normal(k5, (2, 3, 5, 7), dtype=jnp.float32)
    l3 = jax.random.normal(k6, (2, 3, 5, 7), dtype=jnp.float32)
    loss3 = my_loss(y3, l3)
    jax.block_until_ready(loss3)
    ref3 = jnp.mean((y3 - l3) ** 2)
    assert jnp.allclose(loss3, ref3, rtol=1e-5, atol=1e-6), (loss3, ref3)

    print("KERNEL_OK")
</pallas_src>

<mosaic_0001>
module attributes {stable_mosaic.version = 11 : i64} {
  func.func @_mse_sum_kernel(%arg0: i32, %arg1: memref<16x128xf32, #tpu.memory_space<vmem>>, %arg2: memref<16x128xf32, #tpu.memory_space<vmem>>, %arg3: memref<1xf32, #tpu.memory_space<smem>>, %arg4: memref<16x128xf32, #tpu.memory_space<vmem>>) attributes {dimension_semantics = [#tpu.dimension_semantics<arbitrary>], iteration_bounds = array<i64: 1>, scalar_prefetch = 0 : i64, scratch_operands = 1 : i64, tpu.core_type = #tpu.core_type<tc>, window_params = [{transform_indices = @transform_0, window_bounds = array<i64: 16, 128>}, {transform_indices = @transform_1, window_bounds = array<i64: 16, 128>}, {transform_indices = @transform_2, window_bounds = array<i64: 1>}]} {
    %c0_i32 = arith.constant 0 : i32
    %0 = arith.cmpi eq, %arg0, %c0_i32 : i32
    %1 = arith.extui %0 : i1 to i32
    %c0_i32_0 = arith.constant 0 : i32
    %2 = arith.cmpi ne, %1, %c0_i32_0 : i32
    scf.if %2 {
      %cst = arith.constant 0.000000e+00 : f32
      %13 = vector.broadcast %cst : f32 to vector<16x128xf32>
      %c0_10 = arith.constant 0 : index
      %c0_11 = arith.constant 0 : index
      %14 = vector.load %arg4[%c0_10, %c0_11] : memref<16x128xf32, #tpu.memory_space<vmem>>, vector<16x128xf32>
      tpu.vector_store %arg4[%c0_10, %c0_11], %13 {strides = array<i32>} : memref<16x128xf32, #tpu.memory_space<vmem>>, vector<16x128xf32>,
    } else {
    }
    %c0 = arith.constant 0 : index
    %c0_1 = arith.constant 0 : index
    %3 = vector.load %arg1[%c0, %c0_1] : memref<16x128xf32, #tpu.memory_space<vmem>>, vector<16x128xf32>
    %c0_2 = arith.constant 0 : index
    %c0_3 = arith.constant 0 : index
    %4 = vector.load %arg2[%c0_2, %c0_3] : memref<16x128xf32, #tpu.memory_space<vmem>>, vector<16x128xf32>
    %5 = arith.subf %3, %4 : vector<16x128xf32>
    %c0_4 = arith.constant 0 : index
    %c0_5 = arith.constant 0 : index
    %6 = vector.load %arg4[%c0_4, %c0_5] : memref<16x128xf32, #tpu.memory_space<vmem>>, vector<16x128xf32>
    %7 = arith.mulf %5, %5 : vector<16x128xf32>
    %8 = arith.addf %6, %7 : vector<16x128xf32>
    %c0_6 = arith.constant 0 : index
    %c0_7 = arith.constant 0 : index
    %9 = vector.load %arg4[%c0_6, %c0_7] : memref<16x128xf32, #tpu.memory_space<vmem>>, vector<16x128xf32>
    tpu.vector_store %arg4[%c0_6, %c0_7], %8 {strides = array<i32>} : memref<16x128xf32, #tpu.memory_space<vmem>>, vector<16x128xf32>,
    %c0_i32_8 = arith.constant 0 : i32
    %10 = arith.cmpi eq, %arg0, %c0_i32_8 : i32
    %11 = arith.extui %10 : i1 to i32
    %c0_i32_9 = arith.constant 0 : i32
    %12 = arith.cmpi ne, %11, %c0_i32_9 : i32
    scf.if %12 {
      %c0_10 = arith.constant 0 : index
      %c0_11 = arith.constant 0 : index
      %13 = vector.load %arg4[%c0_10, %c0_11] : memref<16x128xf32, #tpu.memory_space<vmem>>, vector<16x128xf32>
      %14 = vector.shape_cast %13 : vector<16x128xf32> to vector<1x16x128xf32>
      %cst = arith.constant dense<0.000000e+00> : vector<1xf32>
      %15 = vector.multi_reduction <add>, %14, %cst [1, 2] : vector<1x16x128xf32> to vector<1xf32>
      %16 = vector.shape_cast %15 : vector<1xf32> to vector<1x1x1xf32>
      %17 = vector.extract %16[0, 0, 0] : f32 from vector<1x1x1xf32>
      %c0_12 = arith.constant 0 : index
      %18 = memref.load %arg3[%c0_12] : memref<1xf32, #tpu.memory_space<smem>>
      memref.store %17, %arg3[%c0_12] : memref<1xf32, #tpu.memory_space<smem>>
    } else {
    }
    return
  }
  func.func @transform_0(%arg0: i32) -> (i32, i32) {
    %c0_i32 = arith.constant 0 : i32
    %c0_i32_0 = arith.constant 0 : i32
    return %arg0, %c0_i32 : i32, i32
  }
  func.func @transform_1(%arg0: i32) -> (i32, i32) {
    %c0_i32 = arith.constant 0 : i32
    %c0_i32_0 = arith.constant 0 : i32
    return %arg0, %c0_i32 : i32, i32
  }
  func.func @transform_2(%arg0: i32) -> i32 {
    %c0_i32 = arith.constant 0 : i32
    %c0_i32_0 = arith.constant 0 : i32
    return %c0_i32 : i32
  }
}

</mosaic_0001>

<llo_original>
// kernel: tpu_custom_call.1
$region0: #{tpu_custom_call.1}
  #allocation0 [shape = 'u32[]', space=smem, size = 0x4, offset = 0x4, fixed_abs, tag = 'smem constant byte address 0x4 - core index']
  #allocation1 [shape = 'u32[144,128]{1,0:T(1,128)}', space=vmem, size = 0x12000, scoped, tag = 'internal scratch']
  #allocation2 [shape = 'f32[16,128]{1,0:T(8,128)}', space=vmem, size = 0x2000, scoped, tag = 'scratch operand']
  %s0 = inlined_call_operand.hbm [shape: f32[16,128], index: 0, kind: input, shape index: {}]
  %s1 = inlined_call_operand.hbm [shape: f32[16,128], index: 1, kind: input, shape index: {}]
  %s2 = inlined_call_operand.hbm [shape: f32[1], index: 2, kind: output, shape index: {}]
  %s3 = sld [smem:[#allocation0]]
  $region34: #{tpu_custom_call.1} parent=0
    _
  %s5 = ssub.s32 1, %s3
  %s6 = scalar_select 0, %s5, %s3
  $region1: #{tpu_custom_call.1} parent=0
    #allocation3 [shape = 'u8[8192]{0}', space=vmem, size = 0x2000, scoped, tag = 'input window, operand 0, single buffered']
    #allocation4 [shape = 's32[1]{0}', space=sflag, size = 0x4, scoped, tag = 'scoped memory for tpu_custom_call.1']
    #allocation5 [shape = 's32[1]{0}', space=sflag, size = 0x4, scoped, tag = 'scoped memory for tpu_custom_call.1']
    #allocation6 [shape = 'u8[8192]{0}', space=vmem, size = 0x2000, scoped, tag = 'input window, operand 1, single buffered']
    #allocation7 [shape = 's32[1]{0}', space=sflag, size = 0x4, scoped, tag = 'scoped memory for tpu_custom_call.1']
    #allocation8 [shape = 'u8[512]{0}', space=smem, size = 0x200, scoped, tag = 'output window, operand 0, single buffered']
    %7 = vsyncpa [#allocation4], 0
    %8 = vsyncpa [#allocation7], 0
    %9 = vsyncpa [#allocation5], 0
    // Predicated region
    $region2: #{tpu_custom_call.1} parent=1 // pred_check
      _
    $region3: #{tpu_custom_call.1} parent=1 // pred_check_branch
      %11 = sbr.rel (0) target = $region5
    $region4: #{tpu_custom_call.1} parent=1 // pred_region
      %s13 = ssub.s32 256, 256
      %14 = vsyncadd [#allocation4], %s13
      %s15 = sshll.u32 [#allocation3], 4
      %s16 = int_to_ptr.vmem [resolvable:$true] %s15
      %21 = dma.hbm_to_vmem [thread:$0]  %s0, 256, %s16, [#allocation4], 128, 128, 8
    $region5: #{tpu_custom_call.1} parent=1 // pred_fallthru
      _
    // Predicated region
    $region6: #{tpu_custom_call.1} parent=1 // pred_check
      _
    $region7: #{tpu_custom_call.1} parent=1 // pred_check_branch
      %23 = sbr.rel (0) target = $region9
    $region8: #{tpu_custom_call.1} parent=1 // pred_region
      %s25 = ssub.s32 256, 256
      %26 = vsyncadd [#allocation7], %s25
      %s27 = sshll.u32 [#allocation6], 4
      %s28 = int_to_ptr.vmem [resolvable:$true] %s27
      %33 = dma.hbm_to_vmem [thread:$0]  %s1, 256, %s28, [#allocation7], 128, 128, 8
    $region9: #{tpu_custom_call.1} parent=1 // pred_fallthru
      _
    // Predicated region
    $region10: #{tpu_custom_call.1} parent=1 // pred_check
      _
    $region11: #{tpu_custom_call.1} parent=1 // pred_check_branch
      %35 = sbr.rel (0) target = $region13
    $region12: #{tpu_custom_call.1} parent=1 // pred_region
      %36 = dma.done [#allocation4], 256
    $region13: #{tpu_custom_call.1} parent=1 // pred_fallthru
      _
    // Predicated region
    $region14: #{tpu_custom_call.1} parent=1 // pred_check
      _
    $region15: #{tpu_custom_call.1} parent=1 // pred_check_branch
      %38 = sbr.rel (0) target = $region17
    $region16: #{tpu_custom_call.1} parent=1 // pred_region
      %39 = dma.done [#allocation7], 256
    $region17: #{tpu_custom_call.1} parent=1 // pred_fallthru
      _
    %p40 = scmp.eq.s32.totalorder 0, 0
    // Predicated region
    $region18: #{tpu_custom_call.1} parent=1 // pred_check
      %p41 = pneg %p40
    $region19: #{tpu_custom_call.1} parent=1 // pred_check_branch
      %43 = sbr.rel (%p41) target = $region21
    $region20: #{tpu_custom_call.1} parent=1 // pred_region
      %44 = vst [vmem:[#allocation2] sm:$0xff] 0.0
      %45 = vst [vmem:[#allocation2 + $0x8] sm:$0xff] 0.0
    $region21: #{tpu_custom_call.1} parent=1 // pred_fallthru
      _
    %v46 = vld [vmem:[#allocation3] sm:$0xff]
    %v47 = vld [vmem:[#allocation3 + $0x8] sm:$0xff]
    %v48 = vld [vmem:[#allocation6] sm:$0xff]
    %v49 = vld [vmem:[#allocation6 + $0x8] sm:$0xff]
    %v50 = vsub.f32 %v46, %v48
    %v51 = vsub.f32 %v47, %v49
    %v52 = vld [vmem:[#allocation2] sm:$0xff]
    %v53 = vld [vmem:[#allocation2 + $0x8] sm:$0xff]
    %v54 = vmul.f32 %v50, %v50
    %v55 = vmul.f32 %v51, %v51
    %v56 = vadd.f32 %v52, %v54
    %v57 = vadd.f32 %v53, %v55
    %58 = vst [vmem:[#allocation2] sm:$0xff] %v56
    %59 = vst [vmem:[#allocation2 + $0x8] sm:$0xff] %v57
    // Predicated region
    $region22: #{tpu_custom_call.1} parent=1 // pred_check
      %p60 = pneg %p40
    $region23: #{tpu_custom_call.1} parent=1 // pred_check_branch
      %62 = sbr.rel (%p60) target = $region25
    $region24: #{tpu_custom_call.1} parent=1 // pred_region
      %v63 = vld [vmem:[#allocation2] sm:$0xff]
      %v64 = vld [vmem:[#allocation2 + $0x8] sm:$0xff]
      %v65 = vadd.f32 %v63, %v64
      %66 = vadd.xlane.f32.xlu0 %v65
      %v67 = vpop.xlane.xlu0 %66
      %v68 = vrot.slane %v67, 4
      %v69 = vadd.f32 %v67, %v68
      %v70 = vrot.slane %v69, 2
      %v71 = vadd.f32 %v69, %v70
      %v72 = vrot.slane %v71, 1
      %v73 = vadd.f32 %v71, %v72
      %s74 = vtos %v73
      %s75 = scalar_lea.smem [#allocation8], 0
      %76 = sst [smem:[%s75]] %s74
    $region25: #{tpu_custom_call.1} parent=1 // pred_fallthru
      _
    // Predicated region
    $region26: #{tpu_custom_call.1} parent=1 // pred_check
      _
    $region27: #{tpu_custom_call.1} parent=1 // pred_check_branch
      %78 = sbr.rel (0) target = $region29
    $region28: #{tpu_custom_call.1} parent=1 // pred_region
      %s80 = ssub.s32 16, 16
      %81 = vsyncadd [#allocation5], %s80
      %84 = dma.smem_to_hbm [#allocation8], 16, %s2, [#allocation5]
    $region29: #{tpu_custom_call.1} parent=1 // pred_fallthru
      _
    // Predicated region
    $region30: #{tpu_custom_call.1} parent=1 // pred_check
      _
    $region31: #{tpu_custom_call.1} parent=1 // pred_check_branch
      %86 = sbr.rel (0) target = $region33
    $region32: #{tpu_custom_call.1} parent=1 // pred_region
      %87 = dma.done [#allocation5], 16
    $region33: #{tpu_custom_call.1} parent=1 // pred_fallthru
      _
    %88 = sfence
    %89 = vsyncpa [#allocation4], 1
    %90 = vsyncpa [#allocation7], 1
    %91 = vsyncpa [#allocation5], 1

</llo_original>
